<compile_context>
chip_gen: v7x
topology: tpu7x:2x2x1
jax: 0.10.0
libtpu: 0.0.40
codegen_flags: <defaults>
</compile_context>

<pallas_src>
import jax
import jax.numpy as jnp
from jax.experimental import pallas as pl
from jax.experimental.pallas import tpu as pltpu


def _round_up(a, b):
    return (a + b - 1) // b * b


def mlp_kernel(x_ref, w1_ref, b1_ref, w2_ref, b2_ref, o_ref, acc_ref):
    # x_ref : (tm, D)  bf16 row tile
    # w1_ref: (D, th)  bf16 fc1 weight column-tile      (torch weight.T)
    # b1_ref: (1, th)  f32  fc1 bias tile
    # w2_ref: (th, D)  bf16 fc2 weight row-tile         (torch weight.T)
    # b2_ref: (1, D)   f32  fc2 bias
    # o_ref : (tm, D)  output tile (written on the last H step)
    # acc_ref: (tm, D) f32 accumulator, resident across the H axis
    j = pl.program_id(1)

    @pl.when(j == 0)
    def _init():
        # Fold the fc2 bias into the accumulator init (one broadcast per tile).
        acc_ref[...] = jnp.broadcast_to(
            b2_ref[...], acc_ref.shape).astype(jnp.float32)

    # fc1 on the MXU: bf16 x bf16 -> f32 accumulate, then bias.
    h = jnp.dot(x_ref[...], w1_ref[...], preferred_element_type=jnp.float32)
    h = h + b1_ref[...]

    # SwiGeLU: h * sigmoid(1.702 * h)  (transcendental routed to the EUP).
    h = h * jax.nn.sigmoid(1.702 * h)

    # fc2 partial product for this H tile, accumulated in f32.
    acc_ref[...] += jnp.dot(h.astype(w2_ref.dtype), w2_ref[...],
                            preferred_element_type=jnp.float32)

    @pl.when(j == pl.num_programs(1) - 1)
    def _finalize():
        o_ref[...] = acc_ref[...].astype(o_ref.dtype)


def _pick_th(D, H, tm, w_itemsize, out_itemsize, budget_bytes):
    """Largest H tile (multiple of 128 dividing H) whose VMEM estimate fits."""
    cands = [H] + [c for c in range(H - 128, 0, -128) if H % c == 0]
    for th in cands:
        nbuf_w = 1 if th == H else 2          # constant blocks single-buffered
        est = (nbuf_w * 2 * D * th * w_itemsize   # w1 + w2 tiles
               + nbuf_w * th * 4 + D * 4          # b1 tile(s) + b2 (f32)
               + 2 * tm * D * w_itemsize          # x tile, double-buffered
               + 2 * tm * D * out_itemsize        # out tile, double-buffered
               + tm * D * 4                       # f32 accumulator scratch
               + tm * th * 4)                     # f32 h intermediate
        if est <= budget_bytes:
            return th
    return cands[-1]


def mlp_forward(x, w1, b1, w2, b2, *, tm=256, th=None,
                compute_dtype=jnp.bfloat16,
                vmem_budget_bytes=48 * 1024 * 1024):
    """nanoGPT MLP forward.

    x : (M, D); w1: (D, H); b1: (H,); w2: (H, D); b2: (D,).
    Weights are stored (in_features, out_features), i.e. torch weight.T.
    """
    M, D = x.shape
    H = w1.shape[1]
    assert w1.shape == (D, H) and w2.shape == (H, D)
    assert b1.shape == (H,) and b2.shape == (D,)
    # Lane alignment: avoid masked partial stores/loads.
    assert D % 128 == 0 and H % 128 == 0, \
        "n_embd and 4*n_embd must be multiples of 128 (pad the model dims)"

    out_dtype = x.dtype

    # Row tile: big enough to keep the MXU fed, clamped to the (sublane-
    # rounded) row count; pad rows so the grid divides evenly.
    # (For v7x megacore, pick tm so that M // tm >= 2 at realistic M.)
    tm = _round_up(max(8, min(tm, _round_up(M, 8))), 8)
    m_pad = _round_up(M, tm)
    if m_pad != M:
        x = jnp.pad(x, ((0, m_pad - M), (0, 0)))

    w_itemsize = jnp.dtype(compute_dtype).itemsize
    if th is None:
        th = _pick_th(D, H, tm, w_itemsize, jnp.dtype(out_dtype).itemsize,
                      vmem_budget_bytes)
    assert H % th == 0 and th % 128 == 0

    x_c = x.astype(compute_dtype)
    w1_c = w1.astype(compute_dtype)
    w2_c = w2.astype(compute_dtype)
    b1_f = b1.reshape(1, H).astype(jnp.float32)
    b2_f = b2.reshape(1, D).astype(jnp.float32)

    n_m, n_h = m_pad // tm, H // th
    # Blocks whose index never changes don't need double buffering; halving
    # their VMEM footprint matters for weight-resident layouts on v7x (64 MiB).
    w_mode = pl.Buffered(1) if n_h == 1 else None
    const_mode = pl.Buffered(1)

    grid_spec = pltpu.PrefetchScalarGridSpec(
        num_scalar_prefetch=0,
        grid=(n_m, n_h),
        in_specs=[
            pl.BlockSpec((tm, D), lambda i, j: (i, 0)),                          # x
            pl.BlockSpec((D, th), lambda i, j: (0, j), pipeline_mode=w_mode),    # w1
            pl.BlockSpec((1, th), lambda i, j: (0, j), pipeline_mode=w_mode),    # b1
            pl.BlockSpec((th, D), lambda i, j: (j, 0), pipeline_mode=w_mode),    # w2
            pl.BlockSpec((1, D), lambda i, j: (0, 0), pipeline_mode=const_mode), # b2
        ],
        out_specs=pl.BlockSpec((tm, D), lambda i, j: (i, 0)),
        scratch_shapes=[pltpu.VMEM((tm, D), jnp.float32)],
    )

    out = pl.pallas_call(
        mlp_kernel,
        out_shape=jax.ShapeDtypeStruct((m_pad, D), out_dtype),
        grid_spec=grid_spec,
        compiler_params=pltpu.CompilerParams(
            # rows independent -> parallel (megacore); H carries the
            # fc2 accumulator -> arbitrary (reduction axis last).
            dimension_semantics=("parallel", "arbitrary"),
            vmem_limit_bytes=64 * 1024 * 1024,
        ),
    )(x_c, w1_c, b1_f, w2_c, b2_f)

    return out[:M] if m_pad != M else out


if __name__ == "__main__":
    # Small shapes consistent with the module: batch=2, seq=8, n_embd=128
    # (lane-aligned), hidden = 4 * n_embd = 512.
    batch, seq, n_embd = 2, 8, 128
    hidden = 4 * n_embd

    key = jax.random.PRNGKey(0)
    kx, kw1, kb1, kw2, kb2 = jax.random.split(key, 5)

    x = jax.random.normal(kx, (batch, seq, n_embd), dtype=jnp.float32)

    # nn.Linear default init (uniform +-1/sqrt(fan_in)); weights kept in the
    # (in_features, out_features) layout, i.e. torch weight.T.
    lim1 = 1.0 / jnp.sqrt(n_embd)
    lim2 = 1.0 / jnp.sqrt(hidden)
    w1 = jax.random.uniform(kw1, (n_embd, hidden), jnp.float32, -lim1, lim1)
    b1 = jax.random.uniform(kb1, (hidden,), jnp.float32, -lim1, lim1)
    w2 = jax.random.uniform(kw2, (hidden, n_embd), jnp.float32, -lim2, lim2)
    b2 = jax.random.uniform(kb2, (n_embd,), jnp.float32, -lim2, lim2)

    x2d = x.reshape(batch * seq, n_embd)
    out = mlp_forward(x2d, w1, b1, w2, b2)
    out = out.reshape(batch, seq, n_embd)
    jax.block_until_ready(out)

    # Reference in plain JAX mirroring the kernel numerics (bf16 matmul inputs,
    # f32 accumulation) for the same torch MLP math: fc2(SwiGeLU(fc1(x))).
    f32, bf16 = jnp.float32, jnp.bfloat16
    hp = jax.lax.Precision.HIGHEST
    xb = x2d.astype(bf16).astype(f32)
    w1b = w1.astype(bf16).astype(f32)
    w2b = w2.astype(bf16).astype(f32)
    h_ref = jnp.dot(xb, w1b, precision=hp) + b1
    h_ref = h_ref * jax.nn.sigmoid(1.702 * h_ref)
    h_ref = h_ref.astype(bf16).astype(f32)
    ref = (jnp.dot(h_ref, w2b, precision=hp) + b2).reshape(batch, seq, n_embd)

    max_err = jnp.max(jnp.abs(out - ref))
    assert jnp.allclose(out, ref, atol=2e-3, rtol=2e-3), (
        f"mismatch vs reference: max abs err {max_err:.3e}")

    print("KERNEL_OK")
</pallas_src>

<mosaic_0001>
module attributes {stable_mosaic.version = 11 : i64} {
  func.func @mlp_kernel(%arg0: i32, %arg1: i32, %arg2: memref<16x128xbf16, #tpu.memory_space<vmem>>, %arg3: memref<128x512xbf16, #tpu.memory_space<vmem>>, %arg4: memref<1x512xf32, #tpu.memory_space<vmem>>, %arg5: memref<512x128xbf16, #tpu.memory_space<vmem>>, %arg6: memref<1x128xf32, #tpu.memory_space<vmem>>, %arg7: memref<16x128xf32, #tpu.memory_space<vmem>>, %arg8: memref<16x128xf32, #tpu.memory_space<vmem>>) attributes {dimension_semantics = [#tpu.dimension_semantics<parallel>, #tpu.dimension_semantics<arbitrary>], iteration_bounds = array<i64: 1, 1>, scalar_prefetch = 0 : i64, scratch_operands = 1 : i64, tpu.core_type = #tpu.core_type<tc>, window_params = [{transform_indices = @transform_0, window_bounds = array<i64: 16, 128>}, {pipeline_mode = #tpu.pipeline_mode<synchronous>, transform_indices = @transform_1, window_bounds = array<i64: 128, 512>}, {pipeline_mode = #tpu.pipeline_mode<synchronous>, transform_indices = @transform_2, window_bounds = array<i64: 1, 512>}, {pipeline_mode = #tpu.pipeline_mode<synchronous>, transform_indices = @transform_3, window_bounds = array<i64: 512, 128>}, {pipeline_mode = #tpu.pipeline_mode<synchronous>, transform_indices = @transform_4, window_bounds = array<i64: 1, 128>}, {transform_indices = @transform_5, window_bounds = array<i64: 16, 128>}]} {
    %c0_i32 = arith.constant 0 : i32
    %0 = arith.cmpi eq, %arg1, %c0_i32 : i32
    %1 = arith.extui %0 : i1 to i32
    %c0_i32_0 = arith.constant 0 : i32
    %2 = arith.cmpi ne, %1, %c0_i32_0 : i32
    scf.if %2 {
      %c0_17 = arith.constant 0 : index
      %c0_18 = arith.constant 0 : index
      %26 = vector.load %arg6[%c0_17, %c0_18] : memref<1x128xf32, #tpu.memory_space<vmem>>, vector<1x128xf32>
      %27 = vector.shape_cast %26 : vector<1x128xf32> to vector<1x128xf32>
      %28 = vector.broadcast %27 : vector<1x128xf32> to vector<16x128xf32>
      %c0_19 = arith.constant 0 : index
      %c0_20 = arith.constant 0 : index
      %29 = vector.load %arg8[%c0_19, %c0_20] : memref<16x128xf32, #tpu.memory_space<vmem>>, vector<16x128xf32>
      tpu.vector_store %arg8[%c0_19, %c0_20], %28 {strides = array<i32>} : memref<16x128xf32, #tpu.memory_space<vmem>>, vector<16x128xf32>,
    } else {
    }
    %c0 = arith.constant 0 : index
    %c0_1 = arith.constant 0 : index
    %3 = vector.load %arg2[%c0, %c0_1] : memref<16x128xbf16, #tpu.memory_space<vmem>>, vector<16x128xbf16>
    %c0_2 = arith.constant 0 : index
    %c0_3 = arith.constant 0 : index
    %4 = vector.load %arg3[%c0_2, %c0_3] : memref<128x512xbf16, #tpu.memory_space<vmem>>, vector<128x512xbf16>
    %cst = arith.constant dense<0.000000e+00> : vector<16x512xf32>
    %5 = tpu.matmul %3, %4, %cst {dimension_numbers = #tpu.dot_dimension_numbers<[1], [0], [0], [1], [0, 0, 1, 1], [], []>} : vector<16x128xbf16>, vector<128x512xbf16>, vector<16x512xf32> -> vector<16x512xf32>
    %c0_4 = arith.constant 0 : index
    %c0_5 = arith.constant 0 : index
    %6 = vector.load %arg4[%c0_4, %c0_5] : memref<1x512xf32, #tpu.memory_space<vmem>>, vector<1x512xf32>
    %7 = vector.broadcast %6 : vector<1x512xf32> to vector<16x512xf32>
    %8 = arith.addf %5, %7 : vector<16x512xf32>
    %cst_6 = arith.constant 1.702000e+00 : f32
    %9 = vector.broadcast %cst_6 : f32 to vector<16x512xf32>
    %10 = arith.mulf %9, %8 : vector<16x512xf32>
    %11 = arith.negf %10 : vector<16x512xf32>
    %12 = math.exp %11 : vector<16x512xf32>
    %cst_7 = arith.constant 1.000000e+00 : f32
    %13 = vector.broadcast %cst_7 : f32 to vector<16x512xf32>
    %14 = arith.addf %13, %12 : vector<16x512xf32>
    %15 = arith.divf %13, %14 : vector<16x512xf32>
    %16 = arith.mulf %8, %15 : vector<16x512xf32>
    %c0_8 = arith.constant 0 : index
    %c0_9 = arith.constant 0 : index
    %17 = vector.load %arg8[%c0_8, %c0_9] : memref<16x128xf32, #tpu.memory_space<vmem>>, vector<16x128xf32>
    %18 = arith.truncf %16 : vector<16x512xf32> to vector<16x512xbf16>
    %c0_10 = arith.constant 0 : index
    %c0_11 = arith.constant 0 : index
    %19 = vector.load %arg5[%c0_10, %c0_11] : memref<512x128xbf16, #tpu.memory_space<vmem>>, vector<512x128xbf16>
    %cst_12 = arith.constant dense<0.000000e+00> : vector<16x128xf32>
    %20 = tpu.matmul %18, %19, %cst_12 {dimension_numbers = #tpu.dot_dimension_numbers<[1], [0], [0], [1], [0, 0, 1, 1], [], []>} : vector<16x512xbf16>, vector<512x128xbf16>, vector<16x128xf32> -> vector<16x128xf32>
    %21 = arith.addf %17, %20 : vector<16x128xf32>
    %c0_13 = arith.constant 0 : index
    %c0_14 = arith.constant 0 : index
    %22 = vector.load %arg8[%c0_13, %c0_14] : memref<16x128xf32, #tpu.memory_space<vmem>>, vector<16x128xf32>
    tpu.vector_store %arg8[%c0_13, %c0_14], %21 {strides = array<i32>} : memref<16x128xf32, #tpu.memory_space<vmem>>, vector<16x128xf32>,
    %c0_i32_15 = arith.constant 0 : i32
    %23 = arith.cmpi eq, %arg1, %c0_i32_15 : i32
    %24 = arith.extui %23 : i1 to i32
    %c0_i32_16 = arith.constant 0 : i32
    %25 = arith.cmpi ne, %24, %c0_i32_16 : i32
    scf.if %25 {
      %c0_17 = arith.constant 0 : index
      %c0_18 = arith.constant 0 : index
      %26 = vector.load %arg8[%c0_17, %c0_18] : memref<16x128xf32, #tpu.memory_space<vmem>>, vector<16x128xf32>
      %c0_19 = arith.constant 0 : index
      %c0_20 = arith.constant 0 : index
      %27 = vector.load %arg7[%c0_19, %c0_20] : memref<16x128xf32, #tpu.memory_space<vmem>>, vector<16x128xf32>
      tpu.vector_store %arg7[%c0_19, %c0_20], %26 {strides = array<i32>} : memref<16x128xf32, #tpu.memory_space<vmem>>, vector<16x128xf32>,
    } else {
    }
    return
  }
  func.func @transform_0(%arg0: i32, %arg1: i32) -> (i32, i32) {
    %c0_i32 = arith.constant 0 : i32
    %c0_i32_0 = arith.constant 0 : i32
    return %arg0, %c0_i32 : i32, i32
  }
  func.func @transform_1(%arg0: i32, %arg1: i32) -> (i32, i32) {
    %c0_i32 = arith.constant 0 : i32
    %c0_i32_0 = arith.constant 0 : i32
    return %c0_i32, %arg1 : i32, i32
  }
  func.func @transform_2(%arg0: i32, %arg1: i32) -> (i32, i32) {
    %c0_i32 = arith.constant 0 : i32
    %c0_i32_0 = arith.constant 0 : i32
    return %c0_i32, %arg1 : i32, i32
  }
  func.func @transform_3(%arg0: i32, %arg1: i32) -> (i32, i32) {
    %c0_i32 = arith.constant 0 : i32
    %c0_i32_0 = arith.constant 0 : i32
    return %arg1, %c0_i32 : i32, i32
  }
  func.func @transform_4(%arg0: i32, %arg1: i32) -> (i32, i32) {
    %c0_i32 = arith.constant 0 : i32
    %c0_i32_0 = arith.constant 0 : i32
    %c0_i32_1 = arith.constant 0 : i32
    return %c0_i32, %c0_i32_0 : i32, i32
  }
  func.func @transform_5(%arg0: i32, %arg1: i32) -> (i32, i32) {
    %c0_i32 = arith.constant 0 : i32
    %c0_i32_0 = arith.constant 0 : i32
    return %arg0, %c0_i32 : i32, i32
  }
}

</mosaic_0001>

<llo_original>
// kernel: tpu_custom_call.1
$region0: #{tpu_custom_call.1}
  #allocation0 [shape = 'u32[]', space=smem, size = 0x4, offset = 0x4, fixed_abs, tag = 'smem constant byte address 0x4 - core index']
  #allocation1 [shape = 'u32[144,128]{1,0:T(1,128)}', space=vmem, size = 0x12000, scoped, tag = 'internal scratch']
  #allocation2 [shape = 'f32[16,128]{1,0:T(8,128)}', space=vmem, size = 0x2000, scoped, tag = 'scratch operand']
  %s0 = inlined_call_operand.hbm [shape: bf16[16,128], index: 0, kind: input, shape index: {}]
  %s1 = inlined_call_operand.hbm [shape: bf16[128,512], index: 1, kind: input, shape index: {}]
  %s2 = inlined_call_operand.hbm [shape: f32[1,512], index: 2, kind: input, shape index: {}]
  %s3 = inlined_call_operand.hbm [shape: bf16[512,128], index: 3, kind: input, shape index: {}]
  %s4 = inlined_call_operand.hbm [shape: f32[1,128], index: 4, kind: input, shape index: {}]
  %s5 = inlined_call_operand.hbm [shape: f32[16,128], index: 5, kind: output, shape index: {}]
  %s6 = sld [smem:[#allocation0]]
  $region58: #{tpu_custom_call.1} parent=0
    _
  %s8 = ssub.s32 1, %s6
  %s9 = scalar_select 0, %s8, %s6
  $region1: #{tpu_custom_call.1} parent=0
    #allocation3 [shape = 'u8[4096]{0}', space=vmem, size = 0x1000, scoped, tag = 'input window, operand 0, single buffered']
    #allocation4 [shape = 's32[1]{0}', space=sflag, size = 0x4, scoped, tag = 'scoped memory for tpu_custom_call.1']
    #allocation5 [shape = 's32[1]{0}', space=sflag, size = 0x4, scoped, tag = 'scoped memory for tpu_custom_call.1']
    #allocation6 [shape = 'u8[131072]{0}', space=vmem, size = 0x20000, scoped, tag = 'input window, operand 1, single buffered']
    #allocation7 [shape = 's32[1]{0}', space=sflag, size = 0x4, scoped, tag = 'scoped memory for tpu_custom_call.1']
    #allocation8 [shape = 'u8[2048]{0}', space=vmem, size = 0x800, scoped, tag = 'input window, operand 2, single buffered']
    #allocation9 [shape = 'u8[131072]{0}', space=vmem, size = 0x20000, scoped, tag = 'input window, operand 3, single buffered']
    #allocation10 [shape = 's32[1]{0}', space=sflag, size = 0x4, scoped, tag = 'scoped memory for tpu_custom_call.1']
    #allocation11 [shape = 'u8[512]{0}', space=vmem, size = 0x400, scoped, tag = 'input window, operand 4, single buffered']
    #allocation12 [shape = 'u8[8192]{0}', space=vmem, size = 0x2000, scoped, tag = 'output window, operand 0, single buffered']
    %10 = vsyncpa [#allocation4], 0
    %11 = vsyncpa [#allocation7], 0
    %12 = vsyncpa [#allocation10], 0
    %13 = vsyncpa [#allocation5], 0
    // Predicated region
    $region2: #{tpu_custom_call.1} parent=1 // pred_check
      _
    $region3: #{tpu_custom_call.1} parent=1 // pred_check_branch
      %15 = sbr.rel (0) target = $region5
    $region4: #{tpu_custom_call.1} parent=1 // pred_region
      %s17 = ssub.s32 128, 128
      %18 = vsyncadd [#allocation4], %s17
      %s19 = sshll.u32 [#allocation3], 4
      %s20 = int_to_ptr.vmem [resolvable:$true] %s19
      %25 = dma.hbm_to_vmem [thread:$0]  %s0, 128, %s20, [#allocation4], 64, 64, 4
    $region5: #{tpu_custom_call.1} parent=1 // pred_fallthru
      _
    // Predicated region
    $region6: #{tpu_custom_call.1} parent=1 // pred_check
      _
    $region7: #{tpu_custom_call.1} parent=1 // pred_check_branch
      %27 = sbr.rel (0) target = $region9
    $region8: #{tpu_custom_call.1} parent=1 // pred_region
      %s29 = ssub.s32 4096, 4096
      %30 = vsyncadd [#allocation7], %s29
      %s31 = sshll.u32 [#allocation6], 4
      %s32 = int_to_ptr.vmem [resolvable:$true] %s31
      %37 = dma.hbm_to_vmem [thread:$0]  %s1, 4096, %s32, [#allocation7], 256, 256, 16
    $region9: #{tpu_custom_call.1} parent=1 // pred_fallthru
      _
    // Predicated region
    $region10: #{tpu_custom_call.1} parent=1 // pred_check
      _
    $region11: #{tpu_custom_call.1} parent=1 // pred_check_branch
      %39 = sbr.rel (0) target = $region13
    $region12: #{tpu_custom_call.1} parent=1 // pred_region
      %s41 = ssub.s32 64, 64
      %42 = vsyncadd [#allocation7], %s41
      %s44 = sshll.u32 [#allocation8], 4
      %s45 = int_to_ptr.vmem [resolvable:$true] %s44
      %47 = dma.hbm_to_vmem [thread:$0]  %s2, 64, %s45, [#allocation7]
    $region13: #{tpu_custom_call.1} parent=1 // pred_fallthru
      _
    // Predicated region
    $region14: #{tpu_custom_call.1} parent=1 // pred_check
      _
    $region15: #{tpu_custom_call.1} parent=1 // pred_check_branch
      %49 = sbr.rel (0) target = $region17
    $region16: #{tpu_custom_call.1} parent=1 // pred_region
      %s51 = ssub.s32 4096, 4096
      %52 = vsyncadd [#allocation10], %s51
      %s53 = sshll.u32 [#allocation9], 4
      %s54 = int_to_ptr.vmem [resolvable:$true] %s53
      %59 = dma.hbm_to_vmem [thread:$0]  %s3, 4096, %s54, [#allocation10], 64, 64, 4
    $region17: #{tpu_custom_call.1} parent=1 // pred_fallthru
      _
    // Predicated region
    $region18: #{tpu_custom_call.1} parent=1 // pred_check
      _
    $region19: #{tpu_custom_call.1} parent=1 // pred_check_branch
      %61 = sbr.rel (0) target = $region21
    $region20: #{tpu_custom_call.1} parent=1 // pred_region
      %s63 = ssub.s32 16, 16
      %64 = vsyncadd [#allocation10], %s63
      %s66 = sshll.u32 [#allocation11], 4
      %s67 = int_to_ptr.vmem [resolvable:$true] %s66
      %69 = dma.hbm_to_vmem [thread:$0]  %s4, 16, %s67, [#allocation10]
    $region21: #{tpu_custom_call.1} parent=1 // pred_fallthru
      _
    // Predicated region
    $region22: #{tpu_custom_call.1} parent=1 // pred_check
      _
    $region23: #{tpu_custom_call.1} parent=1 // pred_check_branch
      %71 = sbr.rel (0) target = $region25
    $region24: #{tpu_custom_call.1} parent=1 // pred_region
      %72 = dma.done [#allocation4], 128
    $region25: #{tpu_custom_call.1} parent=1 // pred_fallthru
      _
    // Predicated region
    $region26: #{tpu_custom_call.1} parent=1 // pred_check
      _
    $region27: #{tpu_custom_call.1} parent=1 // pred_check_branch
      %74 = sbr.rel (0) target = $region29
    $region28: #{tpu_custom_call.1} parent=1 // pred_region
      %75 = dma.done [#allocation7], 4096
    $region29: #{tpu_custom_call.1} parent=1 // pred_fallthru
      _
    // Predicated region
    $region30: #{tpu_custom_call.1} parent=1 // pred_check
      _
    $region31: #{tpu_custom_call.1} parent=1 // pred_check_branch
      %77 = sbr.rel (0) target = $region33
    $region32: #{tpu_custom_call.1} parent=1 // pred_region
      %78 = dma.done [#allocation7], 64
    $region33: #{tpu_custom_call.1} parent=1 // pred_fallthru
      _
    // Predicated region
    $region34: #{tpu_custom_call.1} parent=1 // pred_check
      _
    $region35: #{tpu_custom_call.1} parent=1 // pred_check_branch
      %80 = sbr.rel (0) target = $region37
    $region36: #{tpu_custom_call.1} parent=1 // pred_region
      %81 = dma.done [#allocation10], 4096
    $region37: #{tpu_custom_call.1} parent=1 // pred_fallthru
      _
    // Predicated region
    $region38: #{tpu_custom_call.1} parent=1 // pred_check
      _
    $region39: #{tpu_custom_call.1} parent=1 // pred_check_branch
      %83 = sbr.rel (0) target = $region41
    $region40: #{tpu_custom_call.1} parent=1 // pred_region
      %84 = dma.done [#allocation10], 16
    $region41: #{tpu_custom_call.1} parent=1 // pred_fallthru
      _
    %p86 = scmp.eq.s32.totalorder 0, 0
    // Predicated region
    $region42: #{tpu_custom_call.1} parent=1 // pred_check
      %p87 = pneg %p86
    $region43: #{tpu_custom_call.1} parent=1 // pred_check_branch
      %89 = sbr.rel (%p87) target = $region45
    $region44: #{tpu_custom_call.1} parent=1 // pred_region
      %v90 = vld [vmem:[#allocation11] sm:$0x1]
      %v92 = vlaneseq
      %v93 = vshrl.u32 %v92, 7
      %v94 = vsub.s32 0, %v93
      %v95 = vrot.slane %v90, %v94
      %97 = vst [vmem:[#allocation2] sm:$0xff] %v95
      %98 = vst [vmem:[#allocation2 + $0x8] sm:$0xff] %v95
    $region45: #{tpu_custom_call.1} parent=1 // pred_fallthru
      _
    %v99 = vld [vmem:[#allocation3] sm:$0xf]
    %v100 = vld [vmem:[#allocation3 + $0x4] sm:$0xf]
    %v101 = vld [vmem:[#allocation6] sm:$0xff]
    %v102 = vld [vmem:[#allocation6 + $0x8] sm:$0xff]
    %v103 = vld [vmem:[#allocation6 + $0x10] sm:$0xff]
    %v104 = vld [vmem:[#allocation6 + $0x18] sm:$0xff]
    %v105 = vld [vmem:[#allocation6 + $0x20] sm:$0xff]
    %v106 = vld [vmem:[#allocation6 + $0x28] sm:$0xff]
    %v107 = vld [vmem:[#allocation6 + $0x30] sm:$0xff]
    %v108 = vld [vmem:[#allocation6 + $0x38] sm:$0xff]
    %v109 = vld [vmem:[#allocation6 + $0x40] sm:$0xff]
    %v110 = vld [vmem:[#allocation6 + $0x48] sm:$0xff]
    %v111 = vld [vmem:[#allocation6 + $0x50] sm:$0xff]
    %v112 = vld [vmem:[#allocation6 + $0x58] sm:$0xff]
    %v113 = vld [vmem:[#allocation6 + $0x60] sm:$0xff]
    %v114 = vld [vmem:[#allocation6 + $0x68] sm:$0xff]
    %v115 = vld [vmem:[#allocation6 + $0x70] sm:$0xff]
    %v116 = vld [vmem:[#allocation6 + $0x78] sm:$0xff]
    %v117 = vld [vmem:[#allocation6 + $0x80] sm:$0xff]
    %v118 = vld [vmem:[#allocation6 + $0x88] sm:$0xff]
    %v119 = vld [vmem:[#allocation6 + $0x90] sm:$0xff]
    %v120 = vld [vmem:[#allocation6 + $0x98] sm:$0xff]
    %v121 = vld [vmem:[#allocation6 + $0xa0] sm:$0xff]
    %v122 = vld [vmem:[#allocation6 + $0xa8] sm:$0xff]
    %v123 = vld [vmem:[#allocation6 + $0xb0] sm:$0xff]
    %v124 = vld [vmem:[#allocation6 + $0xb8] sm:$0xff]
    %v125 = vld [vmem:[#allocation6 + $0xc0] sm:$0xff]
    %v126 = vld [vmem:[#allocation6 + $0xc8] sm:$0xff]
    %v127 = vld [vmem:[#allocation6 + $0xd0] sm:$0xff]
    %v128 = vld [vmem:[#allocation6 + $0xd8] sm:$0xff]
    %v129 = vld [vmem:[#allocation6 + $0xe0] sm:$0xff]
    %v130 = vld [vmem:[#allocation6 + $0xe8] sm:$0xff]
    %v131 = vld [vmem:[#allocation6 + $0xf0] sm:$0xff]
    %v132 = vld [vmem:[#allocation6 + $0xf8] sm:$0xff]
    %v133 = vld [vmem:[#allocation8] sm:$0xf]
    %v135 = vlaneseq
    %v136 = vshrl.u32 %v135, 7
    %v137 = vsub.s32 0, %v136
    %v138 = vrot.slane %v133, %v137
    %v139 = vlaneseq
    %v140 = vshrl.u32 %v139, 7
    %v141 = vsub.s32 1, %v140
    %v142 = vrot.slane %v133, %v141
    %v143 = vlaneseq
    %v144 = vshrl.u32 %v143, 7
    %v145 = vsub.s32 2, %v144
    %v146 = vrot.slane %v133, %v145
    %v147 = vlaneseq
    %v148 = vshrl.u32 %v147, 7
    %v149 = vsub.s32 3, %v148
    %v150 = vrot.slane %v133, %v149
    %v157 = vunpack.c.l.b16 %v99
    %v158 = vunpack.c.l.b16 %v100
    %v159 = vpack.c.b16 %v158, %v157
    %v193 = vunpack.c.l.b16 %v101
    %v194 = vunpack.c.h.b16 %v101
    %v195 = vunpack.c.l.b16 %v102
    %v196 = vunpack.c.h.b16 %v102
    %v197 = vunpack.c.l.b16 %v103
    %v198 = vunpack.c.h.b16 %v103
    %v199 = vunpack.c.l.b16 %v104
    %v200 = vunpack.c.h.b16 %v104
    %v201 = vunpack.c.l.b16 %v105
    %v202 = vunpack.c.h.b16 %v105
    %v203 = vunpack.c.l.b16 %v106
    %v204 = vunpack.c.h.b16 %v106
    %v205 = vunpack.c.l.b16 %v107
    %v206 = vunpack.c.h.b16 %v107
    %v207 = vunpack.c.l.b16 %v108
    %v208 = vunpack.c.h.b16 %v108
    %v209 = vunpack.c.l.b16 %v109
    %v210 = vunpack.c.h.b16 %v109
    %v211 = vunpack.c.l.b16 %v110
    %v212 = vunpack.c.h.b16 %v110
    %v213 = vunpack.c.l.b16 %v111
    %v214 = vunpack.c.h.b16 %v111
    %v215 = vunpack.c.l.b16 %v112
    %v216 = vunpack.c.h.b16 %v112
    %v217 = vunpack.c.l.b16 %v113
    %v218 = vunpack.c.h.b16 %v113
    %v219 = vunpack.c.l.b16 %v114
    %v220 = vunpack.c.h.b16 %v114
    %v221 = vunpack.c.l.b16 %v115
    %v222 = vunpack.c.h.b16 %v115
    %v223 = vunpack.c.l.b16 %v116
    %v224 = vunpack.c.h.b16 %v116
    %v225 = vunpack.c.l.b16 %v117
    %v226 = vunpack.c.h.b16 %v117
    %v227 = vunpack.c.l.b16 %v118
    %v228 = vunpack.c.h.b16 %v118
    %v229 = vunpack.c.l.b16 %v119
    %v230 = vunpack.c.h.b16 %v119
    %v231 = vunpack.c.l.b16 %v120
    %v232 = vunpack.c.h.b16 %v120
    %v233 = vunpack.c.l.b16 %v121
    %v234 = vunpack.c.h.b16 %v121
    %v235 = vunpack.c.l.b16 %v122
    %v236 = vunpack.c.h.b16 %v122
    %v237 = vunpack.c.l.b16 %v123
    %v238 = vunpack.c.h.b16 %v123
    %v239 = vunpack.c.l.b16 %v124
    %v240 = vunpack.c.h.b16 %v124
    %v241 = vunpack.c.l.b16 %v125
    %v242 = vunpack.c.h.b16 %v125
    %v243 = vunpack.c.l.b16 %v126
    %v244 = vunpack.c.h.b16 %v126
    %v245 = vunpack.c.l.b16 %v127
    %v246 = vunpack.c.h.b16 %v127
    %v247 = vunpack.c.l.b16 %v128
    %v248 = vunpack.c.h.b16 %v128
    %v249 = vunpack.c.l.b16 %v129
    %v250 = vunpack.c.h.b16 %v129
    %v251 = vunpack.c.l.b16 %v130
    %v252 = vunpack.c.h.b16 %v130
    %v253 = vunpack.c.l.b16 %v131
    %v254 = vunpack.c.h.b16 %v131
    %v255 = vunpack.c.l.b16 %v132
    %v256 = vunpack.c.h.b16 %v132
    %v257 = vpack.c.b16 %v197, %v193
    %v258 = vpack.c.b16 %v198, %v194
    %v259 = vpack.c.b16 %v199, %v195
    %v260 = vpack.c.b16 %v200, %v196
    %v261 = vpack.c.b16 %v205, %v201
    %v262 = vpack.c.b16 %v206, %v202
    %v263 = vpack.c.b16 %v207, %v203
    %v264 = vpack.c.b16 %v208, %v204
    %v265 = vpack.c.b16 %v213, %v209
    %v266 = vpack.c.b16 %v214, %v210
    %v267 = vpack.c.b16 %v215, %v211
    %v268 = vpack.c.b16 %v216, %v212
    %v269 = vpack.c.b16 %v221, %v217
    %v270 = vpack.c.b16 %v222, %v218
    %v271 = vpack.c.b16 %v223, %v219
    %v272 = vpack.c.b16 %v224, %v220
    %v273 = vpack.c.b16 %v229, %v225
    %v274 = vpack.c.b16 %v230, %v226
    %v275 = vpack.c.b16 %v231, %v227
    %v276 = vpack.c.b16 %v232, %v228
    %v277 = vpack.c.b16 %v237, %v233
    %v278 = vpack.c.b16 %v238, %v234
    %v279 = vpack.c.b16 %v239, %v235
    %v280 = vpack.c.b16 %v240, %v236
    %v281 = vpack.c.b16 %v245, %v241
    %v282 = vpack.c.b16 %v246, %v242
    %v283 = vpack.c.b16 %v247, %v243
    %v284 = vpack.c.b16 %v248, %v244
    %v285 = vpack.c.b16 %v253, %v249
    %v286 = vpack.c.b16 %v254, %v250
    %v287 = vpack.c.b16 %v255, %v251
    %v288 = vpack.c.b16 %v256, %v252
    %321 = vmatprep.subr.bf16.mxu0 %v258
    %322 = vmatpush1.bf16.msra.mxu0 %v257
    %323 = vmatprep.subr.bf16.mxu0 %v262
    %324 = vmatpush1.bf16.msra.mxu0 %v261
    %325 = vmatprep.subr.bf16.mxu0 %v266
    %326 = vmatpush1.bf16.msra.mxu0 %v265
    %327 = vmatprep.subr.bf16.mxu0 %v270
    %328 = vmatpush1.bf16.msra.mxu0 %v269
    %329 = vmatprep.subr.bf16.mxu0 %v274
    %330 = vmatpush1.bf16.msra.mxu0 %v273
    %331 = vmatprep.subr.bf16.mxu0 %v278
    %332 = vmatpush1.bf16.msra.mxu0 %v277
    %333 = vmatprep.subr.bf16.mxu0 %v282
    %334 = vmatpush1.bf16.msra.mxu0 %v281
    %335 = vmatprep.subr.bf16.mxu0 %v286
    %336 = vmatpush1.bf16.msra.mxu0 %v285
    %337 = vmatprep.subr.bf16.mxu0 0
    %338 = vmatpush1.bf16.msra.mxu0 0
    %339 = vmatprep.subr.bf16.mxu0 0
    %340 = vmatpush1.bf16.msra.mxu0 0
    %341 = vmatprep.subr.bf16.mxu0 0
    %342 = vmatpush1.bf16.msra.mxu0 0
    %343 = vmatprep.subr.bf16.mxu0 0
    %344 = vmatpush1.bf16.msra.mxu0 0
    %345 = vmatprep.subr.bf16.mxu0 0
    %346 = vmatpush1.bf16.msra.mxu0 0
    %347 = vmatprep.subr.bf16.mxu0 0
    %348 = vmatpush1.bf16.msra.mxu0 0
    %349 = vmatprep.subr.bf16.mxu0 0
    %350 = vmatpush1.bf16.msra.mxu0 0
    %351 = vmatprep.subr.bf16.mxu0 0
    %352 = vmatpush1.bf16.msra.mxu0 0
    %353 = vmatprep.mubr.bf16.mxu0 0
    %354 = vmatmul.mubr.bf16.gmra.mrb[0].mxu0 %v159
    %v355 = vpop.f32.mrb[0].mxu0
    %v356 = vadd.f32 %v138, %v355
    %v357 = vpop.f32.mrb[0].mxu0
    %v358 = vadd.f32 %v142, %v357
    %v359 = vpop.f32.mrb[0].mxu0
    %v360 = vadd.f32 %v138, %v359
    %v361 = vpop.f32.mrb[0].mxu0
    %v362 = vadd.f32 %v142, %v361
    %363 = vdwg.mxu0
    %364 = vmatprep.subr.bf16.mxu0 %v260
    %365 = vmatpush1.bf16.msra.mxu0 %v259
    %366 = vmatprep.subr.bf16.mxu0 %v264
    %367 = vmatpush1.bf16.msra.mxu0 %v263
    %368 = vmatprep.subr.bf16.mxu0 %v268
    %369 = vmatpush1.bf16.msra.mxu0 %v267
    %370 = vmatprep.subr.bf16.mxu0 %v272
    %371 = vmatpush1.bf16.msra.mxu0 %v271
    %372 = vmatprep.subr.bf16.mxu0 %v276
    %373 = vmatpush1.bf16.msra.mxu0 %v275
    %374 = vmatprep.subr.bf16.mxu0 %v280
    %375 = vmatpush1.bf16.msra.mxu0 %v279
    %376 = vmatprep.subr.bf16.mxu0 %v284
    %377 = vmatpush1.bf16.msra.mxu0 %v283
    %378 = vmatprep.subr.bf16.mxu0 %v288
    %379 = vmatpush1.bf16.msra.mxu0 %v287
    %380 = vmatprep.subr.bf16.mxu0 0
    %381 = vmatpush1.bf16.msra.mxu0 0
    %382 = vmatprep.subr.bf16.mxu0 0
    %383 = vmatpush1.bf16.msra.mxu0 0
    %384 = vmatprep.subr.bf16.mxu0 0
    %385 = vmatpush1.bf16.msra.mxu0 0
    %386 = vmatprep.subr.bf16.mxu0 0
    %387 = vmatpush1.bf16.msra.mxu0 0
    %388 = vmatprep.subr.bf16.mxu0 0
    %389 = vmatpush1.bf16.msra.mxu0 0
    %390 = vmatprep.subr.bf16.mxu0 0
    %391 = vmatpush1.bf16.msra.mxu0 0
    %392 = vmatprep.subr.bf16.mxu0 0
    %393 = vmatpush1.bf16.msra.mxu0 0
    %394 = vmatprep.subr.bf16.mxu0 0
    %395 = vmatpush1.bf16.msra.mxu0 0
    %396 = vmatprep.mubr.bf16.mxu0 0
    %397 = vmatmul.mubr.bf16.gmra.mrb[0].mxu0 %v159
    %v398 = vpop.f32.mrb[0].mxu0
    %v399 = vadd.f32 %v146, %v398
    %v400 = vpop.f32.mrb[0].mxu0
    %v401 = vadd.f32 %v150, %v400
    %v402 = vpop.f32.mrb[0].mxu0
    %v403 = vadd.f32 %v146, %v402
    %v404 = vpop.f32.mrb[0].mxu0
    %v405 = vadd.f32 %v150, %v404
    %406 = vdwg.mxu0
    %v407 = vmul.f32 %v356, 1.702
    %v408 = vmul.f32 %v358, 1.702
    %v409 = vmul.f32 %v399, 1.702
    %v410 = vmul.f32 %v401, 1.702
    %v411 = vmul.f32 %v360, 1.702
    %v412 = vmul.f32 %v362, 1.702
    %v413 = vmul.f32 %v403, 1.702
    %v414 = vmul.f32 %v405, 1.702
    %v415 = vxor.u32 %v407, 2147483648
    %v416 = vxor.u32 %v408, 2147483648
    %v417 = vxor.u32 %v409, 2147483648
    %v418 = vxor.u32 %v410, 2147483648
    %v419 = vxor.u32 %v411, 2147483648
    %v420 = vxor.u32 %v412, 2147483648
    %v421 = vxor.u32 %v413, 2147483648
    %v422 = vxor.u32 %v414, 2147483648
    %v423 = vmul.f32 %v415, 1.442695
    %v424 = vpow.pop %v423
    %v425 = vmul.f32 %v416, 1.442695
    %v426 = vpow.pop %v425
    %v427 = vmul.f32 %v417, 1.442695
    %v428 = vpow.pop %v427
    %v429 = vmul.f32 %v418, 1.442695
    %v430 = vpow.pop %v429
    %v431 = vmul.f32 %v419, 1.442695
    %v432 = vpow.pop %v431
    %v433 = vmul.f32 %v420, 1.442695
    %v434 = vpow.pop %v433
    %v435 = vmul.f32 %v421, 1.442695
    %v436 = vpow.pop %v435
    %v437 = vmul.f32 %v422, 1.442695
    %v438 = vpow.pop %v437
    %v439 = vadd.f32 %v424, 1.0
    %v440 = vadd.f32 %v426, 1.0
    %v441 = vadd.f32 %v428, 1.0
    %v442 = vadd.f32 %v430, 1.0
    %v443 = vadd.f32 %v432, 1.0
    %v444 = vadd.f32 %v434, 1.0
    %v445 = vadd.f32 %v436, 1.0
    %v446 = vadd.f32 %v438, 1.0
    %v447 = vrcp.pop %v439
    %v448 = vmul.f32 1.0, %v447
    %v449 = vrcp.pop %v440
    %v450 = vmul.f32 1.0, %v449
    %v451 = vrcp.pop %v441
    %v452 = vmul.f32 1.0, %v451
    %v453 = vrcp.pop %v442
    %v454 = vmul.f32 1.0, %v453
    %v455 = vrcp.pop %v443
    %v456 = vmul.f32 1.0, %v455
    %v457 = vrcp.pop %v444
    %v458 = vmul.f32 1.0, %v457
    %v459 = vrcp.pop %v445
    %v460 = vmul.f32 1.0, %v459
    %v461 = vrcp.pop %v446
    %v462 = vmul.f32 1.0, %v461
    %v463 = vmul.f32 %v356, %v448
    %v464 = vmul.f32 %v358, %v450
    %v465 = vmul.f32 %v399, %v452
    %v466 = vmul.f32 %v401, %v454
    %v467 = vmul.f32 %v360, %v456
    %v468 = vmul.f32 %v362, %v458
    %v469 = vmul.f32 %v403, %v460
    %v470 = vmul.f32 %v405, %v462
    %v471 = vld [vmem:[#allocation2] sm:$0xff]
    %v472 = vld [vmem:[#allocation2 + $0x8] sm:$0xff]
    %v473 = vpack.c.bf16 %v467, %v463
    %v474 = vpack.c.bf16 %v468, %v464
    %v475 = vpack.c.bf16 %v469, %v465
    %v476 = vpack.c.bf16 %v470, %v466
    %v477 = vld [vmem:[#allocation9] sm:$0xf]
    %v478 = vld [vmem:[#allocation9 + $0x4] sm:$0xf]
    %v479 = vld [vmem:[#allocation9 + $0x8] sm:$0xf]
    %v480 = vld [vmem:[#allocation9 + $0xc] sm:$0xf]
    %v481 = vld [vmem:[#allocation9 + $0x10] sm:$0xf]
    %v482 = vld [vmem:[#allocation9 + $0x14] sm:$0xf]
    %v483 = vld [vmem:[#allocation9 + $0x18] sm:$0xf]
    %v484 = vld [vmem:[#allocation9 + $0x1c] sm:$0xf]
    %v485 = vld [vmem:[#allocation9 + $0x20] sm:$0xf]
    %v486 = vld [vmem:[#allocation9 + $0x24] sm:$0xf]
    %v487 = vld [vmem:[#allocation9 + $0x28] sm:$0xf]
    %v488 = vld [vmem:[#allocation9 + $0x2c] sm:$0xf]
    %v489 = vld [vmem:[#allocation9 + $0x30] sm:$0xf]
    %v490 = vld [vmem:[#allocation9 + $0x34] sm:$0xf]
    %v491 = vld [vmem:[#allocation9 + $0x38] sm:$0xf]
    %v492 = vld [vmem:[#allocation9 + $0x3c] sm:$0xf]
    %v493 = vld [vmem:[#allocation9 + $0x40] sm:$0xf]
    %v494 = vld [vmem:[#allocation9 + $0x44] sm:$0xf]
    %v495 = vld [vmem:[#allocation9 + $0x48] sm:$0xf]
    %v496 = vld [vmem:[#allocation9 + $0x4c] sm:$0xf]
    %v497 = vld [vmem:[#allocation9 + $0x50] sm:$0xf]
    %v498 = vld [vmem:[#allocation9 + $0x54] sm:$0xf]
    %v499 = vld [vmem:[#allocation9 + $0x58] sm:$0xf]
    %v500 = vld [vmem:[#allocation9 + $0x5c] sm:$0xf]
    %v501 = vld [vmem:[#allocation9 + $0x60] sm:$0xf]
    %v502 = vld [vmem:[#allocation9 + $0x64] sm:$0xf]
    %v503 = vld [vmem:[#allocation9 + $0x68] sm:$0xf]
    %v504 = vld [vmem:[#allocation9 + $0x6c] sm:$0xf]
    %v505 = vld [vmem:[#allocation9 + $0x70] sm:$0xf]
    %v506 = vld [vmem:[#allocation9 + $0x74] sm:$0xf]
    %v507 = vld [vmem:[#allocation9 + $0x78] sm:$0xf]
    %v508 = vld [vmem:[#allocation9 + $0x7c] sm:$0xf]
    %v509 = vld [vmem:[#allocation9 + $0x80] sm:$0xf]
    %v510 = vld [vmem:[#allocation9 + $0x84] sm:$0xf]
    %v511 = vld [vmem:[#allocation9 + $0x88] sm:$0xf]
    %v512 = vld [vmem:[#allocation9 + $0x8c] sm:$0xf]
    %v513 = vld [vmem:[#allocation9 + $0x90] sm:$0xf]
    %v514 = vld [vmem:[#allocation9 + $0x94] sm:$0xf]
    %v515 = vld [vmem:[#allocation9 + $0x98] sm:$0xf]
    %v516 = vld [vmem:[#allocation9 + $0x9c] sm:$0xf]
    %v517 = vld [vmem:[#allocation9 + $0xa0] sm:$0xf]
    %v518 = vld [vmem:[#allocation9 + $0xa4] sm:$0xf]
    %v519 = vld [vmem:[#allocation9 + $0xa8] sm:$0xf]
    %v520 = vld [vmem:[#allocation9 + $0xac] sm:$0xf]
    %v521 = vld [vmem:[#allocation9 + $0xb0] sm:$0xf]
    %v522 = vld [vmem:[#allocation9 + $0xb4] sm:$0xf]
    %v523 = vld [vmem:[#allocation9 + $0xb8] sm:$0xf]
    %v524 = vld [vmem:[#allocation9 + $0xbc] sm:$0xf]
    %v525 = vld [vmem:[#allocation9 + $0xc0] sm:$0xf]
    %v526 = vld [vmem:[#allocation9 + $0xc4] sm:$0xf]
    %v527 = vld [vmem:[#allocation9 + $0xc8] sm:$0xf]
    %v528 = vld [vmem:[#allocation9 + $0xcc] sm:$0xf]
    %v529 = vld [vmem:[#allocation9 + $0xd0] sm:$0xf]
    %v530 = vld [vmem:[#allocation9 + $0xd4] sm:$0xf]
    %v531 = vld [vmem:[#allocation9 + $0xd8] sm:$0xf]
    %v532 = vld [vmem:[#allocation9 + $0xdc] sm:$0xf]
    %v533 = vld [vmem:[#allocation9 + $0xe0] sm:$0xf]
    %v534 = vld [vmem:[#allocation9 + $0xe4] sm:$0xf]
    %v535 = vld [vmem:[#allocation9 + $0xe8] sm:$0xf]
    %v536 = vld [vmem:[#allocation9 + $0xec] sm:$0xf]
    %v537 = vld [vmem:[#allocation9 + $0xf0] sm:$0xf]
    %v538 = vld [vmem:[#allocation9 + $0xf4] sm:$0xf]
    %v539 = vld [vmem:[#allocation9 + $0xf8] sm:$0xf]
    %v540 = vld [vmem:[#allocation9 + $0xfc] sm:$0xf]
    %v605 = vunpack.c.l.b16 %v477
    %v606 = vunpack.c.l.b16 %v478
    %v607 = vunpack.c.l.b16 %v479
    %v608 = vunpack.c.l.b16 %v480
    %v609 = vunpack.c.l.b16 %v481
    %v610 = vunpack.c.l.b16 %v482
    %v611 = vunpack.c.l.b16 %v483
    %v612 = vunpack.c.l.b16 %v484
    %v613 = vunpack.c.l.b16 %v485
    %v614 = vunpack.c.l.b16 %v486
    %v615 = vunpack.c.l.b16 %v487
    %v616 = vunpack.c.l.b16 %v488
    %v617 = vunpack.c.l.b16 %v489
    %v618 = vunpack.c.l.b16 %v490
    %v619 = vunpack.c.l.b16 %v491
    %v620 = vunpack.c.l.b16 %v492
    %v621 = vunpack.c.l.b16 %v493
    %v622 = vunpack.c.l.b16 %v494
    %v623 = vunpack.c.l.b16 %v495
    %v624 = vunpack.c.l.b16 %v496
    %v625 = vunpack.c.l.b16 %v497
    %v626 = vunpack.c.l.b16 %v498
    %v627 = vunpack.c.l.b16 %v499
    %v628 = vunpack.c.l.b16 %v500
    %v629 = vunpack.c.l.b16 %v501
    %v630 = vunpack.c.l.b16 %v502
    %v631 = vunpack.c.l.b16 %v503
    %v632 = vunpack.c.l.b16 %v504
    %v633 = vunpack.c.l.b16 %v505
    %v634 = vunpack.c.l.b16 %v506
    %v635 = vunpack.c.l.b16 %v507
    %v636 = vunpack.c.l.b16 %v508
    %v637 = vunpack.c.l.b16 %v509
    %v638 = vunpack.c.l.b16 %v510
    %v639 = vunpack.c.l.b16 %v511
    %v640 = vunpack.c.l.b16 %v512
    %v641 = vunpack.c.l.b16 %v513
    %v642 = vunpack.c.l.b16 %v514
    %v643 = vunpack.c.l.b16 %v515
    %v644 = vunpack.c.l.b16 %v516
    %v645 = vunpack.c.l.b16 %v517
    %v646 = vunpack.c.l.b16 %v518
    %v647 = vunpack.c.l.b16 %v519
    %v648 = vunpack.c.l.b16 %v520
    %v649 = vunpack.c.l.b16 %v521
    %v650 = vunpack.c.l.b16 %v522
    %v651 = vunpack.c.l.b16 %v523
    %v652 = vunpack.c.l.b16 %v524
    %v653 = vunpack.c.l.b16 %v525
    %v654 = vunpack.c.l.b16 %v526
    %v655 = vunpack.c.l.b16 %v527
    %v656 = vunpack.c.l.b16 %v528
    %v657 = vunpack.c.l.b16 %v529
    %v658 = vunpack.c.l.b16 %v530
    %v659 = vunpack.c.l.b16 %v531
    %v660 = vunpack.c.l.b16 %v532
    %v661 = vunpack.c.l.b16 %v533
    %v662 = vunpack.c.l.b16 %v534
    %v663 = vunpack.c.l.b16 %v535
    %v664 = vunpack.c.l.b16 %v536
    %v665 = vunpack.c.l.b16 %v537
    %v666 = vunpack.c.l.b16 %v538
    %v667 = vunpack.c.l.b16 %v539
    %v668 = vunpack.c.l.b16 %v540
    %v669 = vpack.c.b16 %v606, %v605
    %v670 = vpack.c.b16 %v608, %v607
    %v671 = vpack.c.b16 %v610, %v609
    %v672 = vpack.c.b16 %v612, %v611
    %v673 = vpack.c.b16 %v614, %v613
    %v674 = vpack.c.b16 %v616, %v615
    %v675 = vpack.c.b16 %v618, %v617
    %v676 = vpack.c.b16 %v620, %v619
    %v677 = vpack.c.b16 %v622, %v621
    %v678 = vpack.c.b16 %v624, %v623
    %v679 = vpack.c.b16 %v626, %v625
    %v680 = vpack.c.b16 %v628, %v627
    %v681 = vpack.c.b16 %v630, %v629
    %v682 = vpack.c.b16 %v632, %v631
    %v683 = vpack.c.b16 %v634, %v633
    %v684 = vpack.c.b16 %v636, %v635
    %v685 = vpack.c.b16 %v638, %v637
    %v686 = vpack.c.b16 %v640, %v639
    %v687 = vpack.c.b16 %v642, %v641
    %v688 = vpack.c.b16 %v644, %v643
    %v689 = vpack.c.b16 %v646, %v645
    %v690 = vpack.c.b16 %v648, %v647
    %v691 = vpack.c.b16 %v650, %v649
    %v692 = vpack.c.b16 %v652, %v651
    %v693 = vpack.c.b16 %v654, %v653
    %v694 = vpack.c.b16 %v656, %v655
    %v695 = vpack.c.b16 %v658, %v657
    %v696 = vpack.c.b16 %v660, %v659
    %v697 = vpack.c.b16 %v662, %v661
    %v698 = vpack.c.b16 %v664, %v663
    %v699 = vpack.c.b16 %v666, %v665
    %v700 = vpack.c.b16 %v668, %v667
    %733 = vmatprep.subr.bf16.mxu0 0
    %734 = vmatpush1.bf16.msra.mxu0 %v669
    %735 = vmatprep.subr.bf16.mxu0 0
    %736 = vmatpush1.bf16.msra.mxu0 %v670
    %737 = vmatprep.subr.bf16.mxu0 0
    %738 = vmatpush1.bf16.msra.mxu0 %v671
    %739 = vmatprep.subr.bf16.mxu0 0
    %740 = vmatpush1.bf16.msra.mxu0 %v672
    %741 = vmatprep.subr.bf16.mxu0 0
    %742 = vmatpush1.bf16.msra.mxu0 %v673
    %743 = vmatprep.subr.bf16.mxu0 0
    %744 = vmatpush1.bf16.msra.mxu0 %v674
    %745 = vmatprep.subr.bf16.mxu0 0
    %746 = vmatpush1.bf16.msra.mxu0 %v675
    %747 = vmatprep.subr.bf16.mxu0 0
    %748 = vmatpush1.bf16.msra.mxu0 %v676
    %749 = vmatprep.subr.bf16.mxu0 0
    %750 = vmatpush1.bf16.msra.mxu0 %v677
    %751 = vmatprep.subr.bf16.mxu0 0
    %752 = vmatpush1.bf16.msra.mxu0 %v678
    %753 = vmatprep.subr.bf16.mxu0 0
    %754 = vmatpush1.bf16.msra.mxu0 %v679
    %755 = vmatprep.subr.bf16.mxu0 0
    %756 = vmatpush1.bf16.msra.mxu0 %v680
    %757 = vmatprep.subr.bf16.mxu0 0
    %758 = vmatpush1.bf16.msra.mxu0 %v681
    %759 = vmatprep.subr.bf16.mxu0 0
    %760 = vmatpush1.bf16.msra.mxu0 %v682
    %761 = vmatprep.subr.bf16.mxu0 0
    %762 = vmatpush1.bf16.msra.mxu0 %v683
    %763 = vmatprep.subr.bf16.mxu0 0
    %764 = vmatpush1.bf16.msra.mxu0 %v684
    %765 = vmatprep.mubr.bf16.mxu0 %v474
    %766 = vmatmul.mubr.bf16.gmra.mrb[0].mxu0 %v473
    %v767 = vpop.f32.mrb[0].mxu0
    %v768 = vadd.f32 0.0, %v767
    %v769 = vpop.f32.mrb[0].mxu0
    %v770 = vpop.f32.mrb[0].mxu0
    %v771 = vadd.f32 0.0, %v770
    %v772 = vpop.f32.mrb[0].mxu0
    %773 = vdwg.mxu0
    %774 = vmatprep.subr.bf16.mxu0 0
    %775 = vmatpush1.bf16.msra.mxu0 %v685
    %776 = vmatprep.subr.bf16.mxu0 0
    %777 = vmatpush1.bf16.msra.mxu0 %v686
    %778 = vmatprep.subr.bf16.mxu0 0
    %779 = vmatpush1.bf16.msra.mxu0 %v687
    %780 = vmatprep.subr.bf16.mxu0 0
    %781 = vmatpush1.bf16.msra.mxu0 %v688
    %782 = vmatprep.subr.bf16.mxu0 0
    %783 = vmatpush1.bf16.msra.mxu0 %v689
    %784 = vmatprep.subr.bf16.mxu0 0
    %785 = vmatpush1.bf16.msra.mxu0 %v690
    %786 = vmatprep.subr.bf16.mxu0 0
    %787 = vmatpush1.bf16.msra.mxu0 %v691
    %788 = vmatprep.subr.bf16.mxu0 0
    %789 = vmatpush1.bf16.msra.mxu0 %v692
    %790 = vmatprep.subr.bf16.mxu0 0
    %791 = vmatpush1.bf16.msra.mxu0 %v693
    %792 = vmatprep.subr.bf16.mxu0 0
    %793 = vmatpush1.bf16.msra.mxu0 %v694
    %794 = vmatprep.subr.bf16.mxu0 0
    %795 = vmatpush1.bf16.msra.mxu0 %v695
    %796 = vmatprep.subr.bf16.mxu0 0
    %797 = vmatpush1.bf16.msra.mxu0 %v696
    %798 = vmatprep.subr.bf16.mxu0 0
    %799 = vmatpush1.bf16.msra.mxu0 %v697
    %800 = vmatprep.subr.bf16.mxu0 0
    %801 = vmatpush1.bf16.msra.mxu0 %v698
    %802 = vmatprep.subr.bf16.mxu0 0
    %803 = vmatpush1.bf16.msra.mxu0 %v699
    %804 = vmatprep.subr.bf16.mxu0 0
    %805 = vmatpush1.bf16.msra.mxu0 %v700
    %806 = vmatprep.mubr.bf16.mxu0 %v476
    %807 = vmatmul.mubr.bf16.gmra.mrb[0].mxu0 %v475
    %v808 = vpop.f32.mrb[0].mxu0
    %v809 = vadd.f32 %v768, %v808
    %v810 = vpop.f32.mrb[0].mxu0
    %v811 = vpop.f32.mrb[0].mxu0
    %v812 = vadd.f32 %v771, %v811
    %v813 = vpop.f32.mrb[0].mxu0
    %814 = vdwg.mxu0
    %v815 = vadd.f32 %v471, %v809
    %v816 = vadd.f32 %v472, %v812
    %817 = vst [vmem:[#allocation2] sm:$0xff] %v815
    %818 = vst [vmem:[#allocation2 + $0x8] sm:$0xff] %v816
    // Predicated region
    $region46: #{tpu_custom_call.1} parent=1 // pred_check
      %p819 = pneg %p86
    $region47: #{tpu_custom_call.1} parent=1 // pred_check_branch
      %821 = sbr.rel (%p819) target = $region49
    $region48: #{tpu_custom_call.1} parent=1 // pred_region
      %v822 = vld [vmem:[#allocation2] sm:$0xff]
      %v823 = vld [vmem:[#allocation2 + $0x8] sm:$0xff]
      %824 = vst [vmem:[#allocation12] sm:$0xff] %v822
      %825 = vst [vmem:[#allocation12 + $0x8] sm:$0xff] %v823
    $region49: #{tpu_custom_call.1} parent=1 // pred_fallthru
      _
    // Predicated region
    $region50: #{tpu_custom_call.1} parent=1 // pred_check
      _
    $region51: #{tpu_custom_call.1} parent=1 // pred_check_branch
      %827 = sbr.rel (0) target = $region53
    $region52: #{tpu_custom_call.1} parent=1 // pred_region
      %s829 = ssub.s32 256, 256
      %830 = vsyncadd [#allocation5], %s829
      %s831 = sshll.u32 [#allocation12], 4
      %s832 = int_to_ptr.vmem [resolvable:$true] %s831
      %837 = dma.vmem_to_hbm [thread:$0]  %s832, 256, %s5, [#allocation5], 128, 128, 8
    $region53: #{tpu_custom_call.1} parent=1 // pred_fallthru
      _
    // Predicated region
    $region54: #{tpu_custom_call.1} parent=1 // pred_check
      _
    $region55: #{tpu_custom_call.1} parent=1 // pred_check_branch
      %839 = sbr.rel (0) target = $region57
    $region56: #{tpu_custom_call.1} parent=1 // pred_region
      %840 = dma.done [#allocation5], 256
    $region57: #{tpu_custom_call.1} parent=1 // pred_fallthru
      _
    %841 = vsyncpa [#allocation4], 1
    %842 = vsyncpa [#allocation7], 1
    %843 = vsyncpa [#allocation10], 1
    %844 = vsyncpa [#allocation5], 1

</llo_original>
